<compile_context>
chip_gen: v7x
topology: tpu7x:2x2x1
jax: 0.10.0
libtpu: 0.0.40
codegen_flags: <defaults>
</compile_context>

<pallas_src>
import functools

import numpy as np
import jax
import jax.numpy as jnp
from jax import lax
from jax.experimental import pallas as pl
from jax.experimental.pallas import tpu as pltpu

LANE = 128


def _round_up(x, m):
    return (x + m - 1) // m * m


def _vmem_capacity_bytes():
    try:
        return int(pltpu.get_tpu_info().vmem_capacity_bytes)
    except Exception:
        return 64 * 1024 * 1024          # conservative fallback (v7x per-TC VMEM)


def _compiler_params(dim_sem, needed_bytes, vmem_cap):
    limit = int(min(vmem_cap * 9 // 10, max(needed_bytes + (4 << 20), 16 << 20)))
    return pltpu.CompilerParams(dimension_semantics=dim_sem, vmem_limit_bytes=limit)


def _full_footprint(n, f, adj_itemsize, io_itemsize):
    return (2 * n * n * adj_itemsize        # double-buffered adjacency block
            + 4 * n * f * io_itemsize       # Wh in + out blocks (x2 buffers each)
            + n * f * 12)                   # in-kernel x32 / x_bf16 / y temps


def _tiled_footprint(tm, n, f, adj_itemsize, io_itemsize):
    return (2 * tm * n * adj_itemsize       # double-buffered adjacency row tile
            + 2 * n * f * adj_itemsize      # x = D^-1/2 Wh block (same dtype as adj)
            + 2 * tm * f * io_itemsize      # output tile
            + tm * f * 12)                  # in-kernel f32 temps


# ---------------------------------------------------------------------------
# Path 1: full-block kernel — one (N, N) adjacency block per batch element.
# ---------------------------------------------------------------------------
def _gcn_full_kernel(adj_ref, wh_ref, out_ref):
    # adj_ref: (N, N) bf16/f32, wh_ref: (N, F) f32, out_ref: (N, F)
    a = adj_ref[...]                                        # no f32 upcast: MXU-native dtype
    ones = jnp.ones((a.shape[1], 1), dtype=a.dtype)
    # Ahat = A + I never materialized: deg = rowsum(A) + 1; rowsum as an MXU matvec.
    deg = jnp.dot(a, ones, preferred_element_type=jnp.float32) + 1.0   # (N, 1)
    dinv = lax.rsqrt(deg)                                   # (N, 1) = diag(D^-1/2), EUP
    x32 = dinv * wh_ref[...]                                # column scaling, once per elem
    x = x32.astype(a.dtype)                                 # bf16 MXU operand
    # Ahat @ x = A @ x + x ; self-loop term kept in f32, f32 accumulation on the MXU.
    y = jnp.dot(a, x, preferred_element_type=jnp.float32) + x32
    out_ref[...] = (dinv * y).astype(out_ref.dtype)         # row scaling on the output


def _gcn_full(adj, wh, vmem_cap):
    B, N, _ = adj.shape
    F = wh.shape[-1]
    needed = _full_footprint(N, F, adj.dtype.itemsize, wh.dtype.itemsize)
    return pl.pallas_call(
        _gcn_full_kernel,
        out_shape=jax.ShapeDtypeStruct((B, N, F), wh.dtype),
        grid=(B,),
        in_specs=[
            pl.BlockSpec((pl.Squeezed(), N, N), lambda b: (b, 0, 0)),
            pl.BlockSpec((pl.Squeezed(), N, F), lambda b: (b, 0, 0)),
        ],
        out_specs=pl.BlockSpec((pl.Squeezed(), N, F), lambda b: (b, 0, 0)),
        compiler_params=_compiler_params(("parallel",), needed, vmem_cap),
    )(adj, wh)


# ---------------------------------------------------------------------------
# Path 2: row-tiled kernel — (tm, N) adjacency row tiles, x precomputed per batch.
# ---------------------------------------------------------------------------
def _gcn_tiled_kernel(adj_ref, x_ref, out_ref, *, tm):
    # adj_ref: (tm, N) adjacency row tile (bf16/f32)
    # x_ref:   (N, F)  pre-scaled features x = D^-1/2 Wh (DMA'd once per batch element)
    # out_ref: (tm, F)
    a = adj_ref[...]
    ones = jnp.ones((a.shape[1], 1), dtype=a.dtype)
    # Per-row degree recomputed from the tile itself (it spans all N columns) -> no extra
    # dinv input and no second HBM pass over the adjacency.
    deg = jnp.dot(a, ones, preferred_element_type=jnp.float32) + 1.0    # (tm, 1)
    dinv_row = lax.rsqrt(deg)
    y = jnp.dot(a, x_ref[...], preferred_element_type=jnp.float32)      # A_tile @ x (MXU)
    off = pl.multiple_of(pl.program_id(1) * tm, tm)
    y = y + x_ref[pl.ds(off, tm), :].astype(jnp.float32)                # + self-loop rows
    out_ref[...] = (dinv_row * y).astype(out_ref.dtype)


def _gcn_tiled(adj, wh, tm, vmem_cap):
    B, N, _ = adj.shape
    F = wh.shape[-1]
    n_tiles = N // tm

    # dinv and x = D^-1/2 Wh via plain jnp so XLA can fuse the rowsum / scaling into the
    # adjacency & Wh producers (one HBM round-trip when the whole pipeline is jitted);
    # the Pallas kernel then streams the adjacency exactly once.
    deg = jnp.sum(adj.astype(jnp.float32), axis=2, keepdims=True) + 1.0
    x = (lax.rsqrt(deg) * wh).astype(adj.dtype)             # bf16 (or f32 for weighted graphs)

    needed = _tiled_footprint(tm, N, F, adj.dtype.itemsize, wh.dtype.itemsize)
    return pl.pallas_call(
        functools.partial(_gcn_tiled_kernel, tm=tm),
        out_shape=jax.ShapeDtypeStruct((B, N, F), wh.dtype),
        grid=(B, n_tiles),
        in_specs=[
            pl.BlockSpec((pl.Squeezed(), tm, N), lambda b, i: (b, i, 0)),   # adj row tile
            pl.BlockSpec((pl.Squeezed(), N, F), lambda b, i: (b, 0, 0)),    # x, once per b
        ],
        out_specs=pl.BlockSpec((pl.Squeezed(), tm, F), lambda b, i: (b, i, 0)),
        compiler_params=_compiler_params(("parallel", "parallel"), needed, vmem_cap),
        # TODO(synk): if profiling shows exposed DMA on the adjacency tile, add
        # pipeline_mode=pl.Buffered(3) to its BlockSpec where VMEM headroom exists.
    )(adj, x)


# ---------------------------------------------------------------------------
# Dispatch + host-side glue (mirrors GraphConvolutionalLayer).
# ---------------------------------------------------------------------------
@functools.partial(jax.jit, static_argnames=("row_tile",))
def gcn_forward(adj, wh, row_tile=None):
    """adj: (B, N, N) bf16/f32 stacked adjacency, wh: (B, N, F) f32 -> (B, N, F)."""
    B, N, _ = adj.shape
    F = wh.shape[-1]

    # Lane-dense padding: pad N (adjacency lane dim / MXU K) and F (output lane dim) to
    # multiples of 128, slice back afterwards.  Zero padding is exact: padded rows get
    # deg = 1 and zero features, so they contribute nothing and emit zero output rows.
    n_pad = max(_round_up(N, LANE), LANE)
    f_pad = max(_round_up(F, LANE), LANE)
    adj_p = adj if n_pad == N else jnp.pad(adj, ((0, 0), (0, n_pad - N), (0, n_pad - N)))
    wh_p = wh if (n_pad == N and f_pad == F) else jnp.pad(
        wh, ((0, 0), (0, n_pad - N), (0, f_pad - F)))

    vmem_cap = _vmem_capacity_bytes()
    budget = int(vmem_cap * 0.8)
    full_bytes = _full_footprint(n_pad, f_pad, adj_p.dtype.itemsize, wh_p.dtype.itemsize)

    if row_tile is None:
        max_tm = 512 if vmem_cap >= 100 * (1 << 20) else 256     # v7x (64 MiB): cap tm at 256
        # On v7x's 2 TensorCores a grid of (B,) starves a core when B is tiny: prefer tiles.
        prefer_tiled = (B == 1 and n_pad > LANE)
        if full_bytes <= budget and not prefer_tiled:
            return _gcn_full(adj_p, wh_p, vmem_cap)[:, :N, :F]
        row_tile = next(
            (t for t in (max_tm, 256, 128)
             if n_pad % t == 0 and t < n_pad
             and _tiled_footprint(t, n_pad, f_pad, adj_p.dtype.itemsize,
                                  wh_p.dtype.itemsize) <= budget),
            128 if n_pad > 128 else n_pad)                        # never drop below tm=128

    if row_tile >= n_pad or n_pad % row_tile != 0 or row_tile % 8 != 0:
        return _gcn_full(adj_p, wh_p, vmem_cap)[:, :N, :F]
    return _gcn_tiled(adj_p, wh_p, int(row_tile), vmem_cap)[:, :N, :F]


def stack_graphs(adj_list, h_size, dtype=jnp.bfloat16):
    """Mirror of GraphConvolutionalLayer.stack_graphs — pure host-side list glue.

    bf16 is exact for the 0/1 entries built here and halves HBM traffic on the dominant
    (B, N, N) tensor; pass dtype=jnp.float32 for real-valued weighted adjacencies.
    """
    mats = []
    for a in adj_list:
        if a is None:
            mats.append(jnp.eye(h_size, dtype=jnp.float32))
        else:
            a = jnp.asarray(a, dtype=jnp.float32)
            m = jnp.zeros((h_size, h_size), dtype=jnp.float32)
            # torch code uses a.shape[1] for both dims (square adjacency assumed)
            m = m.at[: a.shape[1], : a.shape[1]].add(a)
            mats.append(m)
    return jnp.stack(mats, axis=0).astype(dtype)


def graph_conv_layer_forward(adj_list, wh, row_tile=None, adj_dtype=jnp.bfloat16):
    """Full module forward: list-of-adjacencies (or None) + Wh (B, N, F)."""
    # TODO(synk): in production, jit the adjacency construction together with gcn_forward
    # so XLA fuses the degree rowsum into the adjacency producer (single HBM round-trip).
    adj = stack_graphs(adj_list, wh.shape[1], dtype=adj_dtype)
    return gcn_forward(adj, wh, row_tile=row_tile)


def _reference(adj_list, wh):
    """Pure-JAX reference replicating the torch forward exactly (all f32)."""
    n = wh.shape[1]
    a = stack_graphs(adj_list, n, dtype=jnp.float32)
    a = a + jnp.eye(n, dtype=jnp.float32)[None]
    deg = jnp.sum(a, axis=2)                                    # (B, N)
    d = deg[:, None, :] * jnp.eye(n, dtype=jnp.float32)[None]   # (B, N, N) diag
    r = jnp.linalg.inv(jnp.sqrt(d))
    return r @ a @ r @ wh


if __name__ == "__main__":
    key = jax.random.PRNGKey(0)
    B, N, F = 2, 16, 32

    k1, k2 = jax.random.split(key)
    # Node features Wh: (B, N, F)
    wh = jax.random.normal(k1, (B, N, F), dtype=jnp.float32)

    # Adjacency list: one smaller (8x8) symmetric binary graph (exercises padding),
    # one None (exercises the identity path).
    sub = jax.random.bernoulli(k2, 0.4, (8, 8)).astype(jnp.float32)
    sub = jnp.triu(sub, 1)
    sub = sub + sub.T
    adj_list = [sub, None]

    ref = jax.block_until_ready(_reference(adj_list, wh))

    # Full-block path (auto-selected at these small shapes).  bf16 MXU operands -> 2e-2 tol.
    out_full = jax.block_until_ready(graph_conv_layer_forward(adj_list, wh))
    np.testing.assert_allclose(np.asarray(out_full), np.asarray(ref), rtol=2e-2, atol=2e-2)

    # Row-tiled path (forced small tile purely to exercise the code path at N_pad=128).
    out_tiled = jax.block_until_ready(graph_conv_layer_forward(adj_list, wh, row_tile=64))
    np.testing.assert_allclose(np.asarray(out_tiled), np.asarray(ref), rtol=2e-2, atol=2e-2)

    print("KERNEL_OK")
</pallas_src>

<mosaic_0001>
module attributes {stable_mosaic.version = 11 : i64} {
  func.func @_gcn_full_kernel(%arg0: i32, %arg1: memref<1x128x128xbf16, #tpu.memory_space<vmem>>, %arg2: memref<1x128x128xf32, #tpu.memory_space<vmem>>, %arg3: memref<1x128x128xf32, #tpu.memory_space<vmem>>) attributes {dimension_semantics = [#tpu.dimension_semantics<parallel>], iteration_bounds = array<i64: 2>, scalar_prefetch = 0 : i64, scratch_operands = 0 : i64, tpu.core_type = #tpu.core_type<tc>, window_params = [{transform_indices = @transform_0, window_bounds = array<i64: 1, 128, 128>}, {transform_indices = @transform_1, window_bounds = array<i64: 1, 128, 128>}, {transform_indices = @transform_2, window_bounds = array<i64: 1, 128, 128>}]} {
    %c0 = arith.constant 0 : index
    %c0_0 = arith.constant 0 : index
    %c0_1 = arith.constant 0 : index
    %0 = vector.load %arg1[%c0, %c0_0, %c0_1] : memref<1x128x128xbf16, #tpu.memory_space<vmem>>, vector<1x128x128xbf16>
    %1 = vector.shape_cast %0 : vector<1x128x128xbf16> to vector<128x128xbf16>
    %cst = arith.constant 1.000000e+00 : bf16
    %2 = vector.broadcast %cst : bf16 to vector<128x1xbf16>
    %cst_2 = arith.constant dense<0.000000e+00> : vector<128x1xf32>
    %3 = tpu.matmul %1, %2, %cst_2 {dimension_numbers = #tpu.dot_dimension_numbers<[1], [0], [0], [1], [0, 0, 1, 1], [], []>} : vector<128x128xbf16>, vector<128x1xbf16>, vector<128x1xf32> -> vector<128x1xf32>
    %cst_3 = arith.constant 1.000000e+00 : f32
    %4 = vector.broadcast %cst_3 : f32 to vector<128x1xf32>
    %5 = arith.addf %3, %4 : vector<128x1xf32>
    %6 = math.rsqrt %5 : vector<128x1xf32>
    %c0_4 = arith.constant 0 : index
    %c0_5 = arith.constant 0 : index
    %c0_6 = arith.constant 0 : index
    %7 = vector.load %arg2[%c0_4, %c0_5, %c0_6] : memref<1x128x128xf32, #tpu.memory_space<vmem>>, vector<1x128x128xf32>
    %8 = vector.shape_cast %7 : vector<1x128x128xf32> to vector<128x128xf32>
    %9 = vector.broadcast %6 : vector<128x1xf32> to vector<128x128xf32>
    %10 = arith.mulf %9, %8 : vector<128x128xf32>
    %11 = arith.truncf %10 : vector<128x128xf32> to vector<128x128xbf16>
    %cst_7 = arith.constant dense<0.000000e+00> : vector<128x128xf32>
    %12 = tpu.matmul %1, %11, %cst_7 {dimension_numbers = #tpu.dot_dimension_numbers<[1], [0], [0], [1], [0, 0, 1, 1], [], []>} : vector<128x128xbf16>, vector<128x128xbf16>, vector<128x128xf32> -> vector<128x128xf32>
    %13 = arith.addf %12, %10 : vector<128x128xf32>
    %14 = vector.broadcast %6 : vector<128x1xf32> to vector<128x128xf32>
    %15 = arith.mulf %14, %13 : vector<128x128xf32>
    %c0_8 = arith.constant 0 : index
    %c0_9 = arith.constant 0 : index
    %c0_10 = arith.constant 0 : index
    %16 = vector.load %arg3[%c0_8, %c0_9, %c0_10] : memref<1x128x128xf32, #tpu.memory_space<vmem>>, vector<1x128x128xf32>
    %17 = vector.shape_cast %16 : vector<1x128x128xf32> to vector<128x128xf32>
    %18 = vector.shape_cast %15 : vector<128x128xf32> to vector<1x128x128xf32>
    tpu.vector_store %arg3[%c0_8, %c0_9, %c0_10], %18 {strides = array<i32>} : memref<1x128x128xf32, #tpu.memory_space<vmem>>, vector<1x128x128xf32>,
    return
  }
  func.func @transform_0(%arg0: i32) -> (i32, i32, i32) {
    %c0_i32 = arith.constant 0 : i32
    %c0_i32_0 = arith.constant 0 : i32
    %c0_i32_1 = arith.constant 0 : i32
    return %arg0, %c0_i32, %c0_i32_0 : i32, i32, i32
  }
  func.func @transform_1(%arg0: i32) -> (i32, i32, i32) {
    %c0_i32 = arith.constant 0 : i32
    %c0_i32_0 = arith.constant 0 : i32
    %c0_i32_1 = arith.constant 0 : i32
    return %arg0, %c0_i32, %c0_i32_0 : i32, i32, i32
  }
  func.func @transform_2(%arg0: i32) -> (i32, i32, i32) {
    %c0_i32 = arith.constant 0 : i32
    %c0_i32_0 = arith.constant 0 : i32
    %c0_i32_1 = arith.constant 0 : i32
    return %arg0, %c0_i32, %c0_i32_0 : i32, i32, i32
  }
}

</mosaic_0001>

<llo_original>
// kernel: gcn_forward.1
$region0: #{gcn_forward.1}
  #allocation0 [shape = 'u32[]', space=smem, size = 0x4, offset = 0x4, fixed_abs, tag = 'smem constant byte address 0x4 - core index']
  #allocation1 [shape = 'u32[144,128]{1,0:T(1,128)}', space=vmem, size = 0x12000, scoped, tag = 'internal scratch']
  %s0 = inlined_call_operand.vmem [shape: bf16[2,128,128], index: 0, kind: input, shape index: {}]
  %s1 = inlined_call_operand.vmem [shape: f32[2,128,128], index: 1, kind: input, shape index: {}]
  %s2 = inlined_call_operand.vmem [shape: f32[2,128,128], index: 2, kind: output, shape index: {}]
  %s3 = sld [smem:[#allocation0]]
  $region41: #{gcn_forward.1} parent=0
    _
  %s5 = ssub.s32 1, %s3
  %s6 = scalar_select 0, %s5, %s3
  loop: start=0, step=1, limit=4
  $region2: #{gcn_forward.1} parent=0 // loop_pre_header
    _
  $region3: #{gcn_forward.1} parent=0 // loop_header
    %s8 = sphi 0, %s12
    %p9 = scmp.ge.s32.totalorder %s8, 4
    %s18 = sphi 0, %s20
    %s21 = sphi 0, %s18
    %s22 = sphi 0, %s21
    %s38 = sphi 0, %s22
    %s44 = sphi 0, %s46
    %s47 = sphi 0, %s44
    %s48 = sphi 0, %s47
    %s64 = sphi 0, %s48
    %s70 = sphi 0, %s72
    %s73 = sphi 0, %s70
    %s74 = sphi 0, %s73
    %s90 = sphi 0, %s74
  $region4: #{gcn_forward.1} parent=0 // loop_header_branch
    %11 = sbr.rel (%p9) target = $region8
  $region5: #{gcn_forward.1} parent=0 // loop_body
    %s13 = ssub.s32 %s8, 1
    %s14 = ssub.s32 %s8, 2
    %s15 = sadd.s32 %s8, 1
    %s16 = ssub.s32 %s8, %s15
    %p17 = scmp.eq.s32.totalorder %s16, 0
    %s19 = sadd.s32 %s18, 1
    %s20 = scalar_select %p17, %s18, %s19
    %p23 = pneg %p17
    %p24 = scmp.eq.s32.totalorder %s8, 1
    %p25 = por %p23, %p24
    %p26 = scmp.ne.s32.totalorder %s18, %s21
    %p27 = scmp.eq.s32.totalorder %s8, 0
    %p28 = por %p26, %p27
    %p29 = scmp.ne.s32.totalorder %s18, %s21
    %p30 = scmp.eq.s32.totalorder %s13, 1
    %p31 = por %p29, %p30
    %p32 = scmp.ne.s32.totalorder %s21, %s22
    %p33 = scmp.eq.s32.totalorder %s13, 0
    %p34 = por %p32, %p33
    %p35 = scmp.ne.s32.totalorder %s21, %s22
    %p36 = scmp.eq.s32.totalorder %s14, 1
    %p37 = por %p35, %p36
    %p39 = scmp.ne.s32.totalorder %s22, %s38
    %p40 = scmp.eq.s32.totalorder %s14, 0
    %p41 = por %p39, %p40
    %s42 = ssub.s32 %s8, %s15
    %p43 = scmp.eq.s32.totalorder %s42, 0
    %s45 = sadd.s32 %s44, 1
    %s46 = scalar_select %p43, %s44, %s45
    %p49 = pneg %p43
    %p50 = scmp.eq.s32.totalorder %s8, 1
    %p51 = por %p49, %p50
    %p52 = scmp.ne.s32.totalorder %s44, %s47
    %p53 = scmp.eq.s32.totalorder %s8, 0
    %p54 = por %p52, %p53
    %p55 = scmp.ne.s32.totalorder %s44, %s47
    %p56 = scmp.eq.s32.totalorder %s13, 1
    %p57 = por %p55, %p56
    %p58 = scmp.ne.s32.totalorder %s47, %s48
    %p59 = scmp.eq.s32.totalorder %s13, 0
    %p60 = por %p58, %p59
    %p61 = scmp.ne.s32.totalorder %s47, %s48
    %p62 = scmp.eq.s32.totalorder %s14, 1
    %p63 = por %p61, %p62
    %p65 = scmp.ne.s32.totalorder %s48, %s64
    %p66 = scmp.eq.s32.totalorder %s14, 0
    %p67 = por %p65, %p66
    %s68 = ssub.s32 %s8, %s15
    %p69 = scmp.eq.s32.totalorder %s68, 0
    %s71 = sadd.s32 %s70, 1
    %s72 = scalar_select %p69, %s70, %s71
    %p75 = pneg %p69
    %p76 = scmp.eq.s32.totalorder %s8, 1
    %p77 = por %p75, %p76
    %p78 = scmp.ne.s32.totalorder %s70, %s73
    %p79 = scmp.eq.s32.totalorder %s8, 0
    %p80 = por %p78, %p79
    %p81 = scmp.ne.s32.totalorder %s70, %s73
    %p82 = scmp.eq.s32.totalorder %s13, 1
    %p83 = por %p81, %p82
    %p84 = scmp.ne.s32.totalorder %s73, %s74
    %p85 = scmp.eq.s32.totalorder %s13, 0
    %p86 = por %p84, %p85
    %p87 = scmp.ne.s32.totalorder %s73, %s74
    %p88 = scmp.eq.s32.totalorder %s14, 1
    %p89 = por %p87, %p88
    %p91 = scmp.ne.s32.totalorder %s74, %s90
    %p92 = scmp.eq.s32.totalorder %s14, 0
    %p93 = por %p91, %p92
    %p94 = scmp.le.s32.totalorder 1, %s8
    %p95 = scmp.lt.s32.totalorder %s8, 3
    %p96 = pnand %p94, %p95
    %p97 = pneg %p96
    // Predicated region
    $region9: #{gcn_forward.1} parent=5 // pred_check
      _
    $region10: #{gcn_forward.1} parent=5 // pred_check_branch
      %99 = sbr.rel (%p96) target = $region12
    $region11: #{gcn_forward.1} parent=5 // pred_region
      %s100 = ssub.s32 %s8, 1
    $region12: #{gcn_forward.1} parent=5 // pred_fallthru
      _
    %p101 = scmp.lt.s32.totalorder %s8, 2
    // Predicated region
    $region13: #{gcn_forward.1} parent=5 // pred_check
      %p102 = pneg %p101
    $region14: #{gcn_forward.1} parent=5 // pred_check_branch
      %104 = sbr.rel (%p102) target = $region16
    $region15: #{gcn_forward.1} parent=5 // pred_region
      // Predicated region
      $region17: #{gcn_forward.1} parent=15 // pred_check
        %p105 = pneg %p28
      $region18: #{gcn_forward.1} parent=15 // pred_check_branch
        %107 = sbr.rel (%p105) target = $region20
      $region19: #{gcn_forward.1} parent=15 // pred_region
        %p108 = scmp.lt.s32.totalorder %s8, 1
        %s109 = scalar_select %p108, %s8, 1
        %s110 = smul.addr %s109, 16
        %s111 = smul.addr %s110, 4
        %s112 = scalar_lea.vmem %s0, %s111
      $region20: #{gcn_forward.1} parent=15 // pred_fallthru
        _
      // Predicated region
      $region21: #{gcn_forward.1} parent=15 // pred_check
        %p113 = pneg %p54
      $region22: #{gcn_forward.1} parent=15 // pred_check_branch
        %115 = sbr.rel (%p113) target = $region24
      $region23: #{gcn_forward.1} parent=15 // pred_region
        %p116 = scmp.lt.s32.totalorder %s8, 1
        %s117 = scalar_select %p116, %s8, 1
        %s118 = smul.addr %s117, 16
        %s119 = smul.addr %s118, 8
        %s120 = scalar_lea.vmem %s1, %s119
      $region24: #{gcn_forward.1} parent=15 // pred_fallthru
        _
    $region16: #{gcn_forward.1} parent=5 // pred_fallthru
      _
    %p121 = scmp.le.s32.totalorder 1, %s8
    %p122 = scmp.lt.s32.totalorder %s8, 3
    %p123 = pnand %p121, %p122
    %p124 = pneg %p123
    // Predicated region
    $region25: #{gcn_forward.1} parent=5 // pred_check
      _
    $region26: #{gcn_forward.1} parent=5 // pred_check_branch
      %126 = sbr.rel (%p123) target = $region28
    $region27: #{gcn_forward.1} parent=5 // pred_region
      %s127 = ssub.s32 %s8, 1
      %p128 = scmp.lt.s32.totalorder %s13, 1
      %s129 = scalar_select %p128, %s13, 1
      %s130 = smul.addr %s129, 16
      %s131 = smul.addr %s130, 4
      %s132 = scalar_lea.vmem %s0, %s131
      %p133 = pneg %p34
      %p134 = pneg %p31
      %p135 = scmp.lt.s32.totalorder %s13, 1
      %s136 = scalar_select %p135, %s13, 1
      %s137 = smul.addr %s136, 16
      %s138 = smul.addr %s137, 8
      %s139 = scalar_lea.vmem %s1, %s138
      %p140 = pneg %p60
      %p141 = pneg %p57
      %p142 = pneg %p86
      %p143 = pneg %p83
      %p144 = scmp.lt.s32.totalorder %s13, 1
      %s145 = scalar_select %p144, %s13, 1
      %s146 = smul.addr %s145, 16
      %s147 = smul.addr %s146, 8
      %s148 = scalar_lea.vmem %s2, %s147
      %p149 = scmp.lt.s32.totalorder %s13, 1
      %s150 = scalar_select %p149, %s13, 1
      %s151 = smul.addr %s150, 16
      %s152 = smul.addr %s151, 4
      %s153 = scalar_lea.vmem %s0, %s152
      %p154 = scmp.lt.s32.totalorder %s13, 1
      %s155 = scalar_select %p154, %s13, 1
      %s156 = smul.addr %s155, 16
      %s157 = smul.addr %s156, 8
      %s158 = scalar_lea.vmem %s1, %s157
      %p159 = scmp.lt.s32.totalorder %s13, 1
      %s160 = scalar_select %p159, %s13, 1
      %s161 = smul.addr %s160, 16
      %s162 = smul.addr %s161, 8
      %s163 = scalar_lea.vmem %s2, %s162
      %v166 = vld [vmem:[%s153] sm:$0xf]
      %v167 = vld [vmem:[%s153 + $0x4] sm:$0xf]
      %v168 = vld [vmem:[%s153 + $0x8] sm:$0xf]
      %v169 = vld [vmem:[%s153 + $0xc] sm:$0xf]
      %v170 = vld [vmem:[%s153 + $0x10] sm:$0xf]
      %v171 = vld [vmem:[%s153 + $0x14] sm:$0xf]
      %v172 = vld [vmem:[%s153 + $0x18] sm:$0xf]
      %v173 = vld [vmem:[%s153 + $0x1c] sm:$0xf]
      %v174 = vld [vmem:[%s153 + $0x20] sm:$0xf]
      %v175 = vld [vmem:[%s153 + $0x24] sm:$0xf]
      %v176 = vld [vmem:[%s153 + $0x28] sm:$0xf]
      %v177 = vld [vmem:[%s153 + $0x2c] sm:$0xf]
      %v178 = vld [vmem:[%s153 + $0x30] sm:$0xf]
      %v179 = vld [vmem:[%s153 + $0x34] sm:$0xf]
      %v180 = vld [vmem:[%s153 + $0x38] sm:$0xf]
      %v181 = vld [vmem:[%s153 + $0x3c] sm:$0xf]
      %v198 = vunpack.c.l.b16 %v166
      %v199 = vunpack.c.l.b16 %v167
      %v200 = vunpack.c.l.b16 %v168
      %v201 = vunpack.c.l.b16 %v169
      %v202 = vunpack.c.l.b16 %v170
      %v203 = vunpack.c.l.b16 %v171
      %v204 = vunpack.c.l.b16 %v172
      %v205 = vunpack.c.l.b16 %v173
      %v206 = vunpack.c.l.b16 %v174
      %v207 = vunpack.c.l.b16 %v175
      %v208 = vunpack.c.l.b16 %v176
      %v209 = vunpack.c.l.b16 %v177
      %v210 = vunpack.c.l.b16 %v178
      %v211 = vunpack.c.l.b16 %v179
      %v212 = vunpack.c.l.b16 %v180
      %v213 = vunpack.c.l.b16 %v181
      %v214 = vpack.c.b16 %v199, %v198
      %v215 = vpack.c.b16 %v201, %v200
      %v216 = vpack.c.b16 %v203, %v202
      %v217 = vpack.c.b16 %v205, %v204
      %v218 = vpack.c.b16 %v207, %v206
      %v219 = vpack.c.b16 %v209, %v208
      %v220 = vpack.c.b16 %v211, %v210
      %v221 = vpack.c.b16 %v213, %v212
      %230 = vmatprep.subr.bf16.mxu0 0
      %231 = vmatpush1.bf16.msra.mxu0 1065369472
      %232 = vmatprep.subr.bf16.mxu0 0
      %233 = vmatpush1.bf16.msra.mxu0 1065369472
      %234 = vmatprep.subr.bf16.mxu0 0
      %235 = vmatpush1.bf16.msra.mxu0 1065369472
      %236 = vmatprep.subr.bf16.mxu0 0
      %237 = vmatpush1.bf16.msra.mxu0 1065369472
      %238 = vmatprep.subr.bf16.mxu0 0
      %239 = vmatpush1.bf16.msra.mxu0 1065369472
      %240 = vmatprep.subr.bf16.mxu0 0
      %241 = vmatpush1.bf16.msra.mxu0 1065369472
      %242 = vmatprep.subr.bf16.mxu0 0
      %243 = vmatpush1.bf16.msra.mxu0 1065369472
      %244 = vmatprep.subr.bf16.mxu0 0
      %245 = vmatpush1.bf16.msra.mxu0 1065369472
      %246 = vmatprep.subr.bf16.mxu0 0
      %247 = vmatpush1.bf16.msra.mxu0 0
      %248 = vmatprep.subr.bf16.mxu0 0
      %249 = vmatpush1.bf16.msra.mxu0 0
      %250 = vmatprep.subr.bf16.mxu0 0
      %251 = vmatpush1.bf16.msra.mxu0 0
      %252 = vmatprep.subr.bf16.mxu0 0
      %253 = vmatpush1.bf16.msra.mxu0 0
      %254 = vmatprep.subr.bf16.mxu0 0
      %255 = vmatpush1.bf16.msra.mxu0 0
      %256 = vmatprep.subr.bf16.mxu0 0
      %257 = vmatpush1.bf16.msra.mxu0 0
      %258 = vmatprep.subr.bf16.mxu0 0
      %259 = vmatpush1.bf16.msra.mxu0 0
      %260 = vmatprep.subr.bf16.mxu0 0
      %261 = vmatpush1.bf16.msra.mxu0 0
      %262 = vmatprep.mubr.bf16.mxu0 0
      %263 = vmatmul.mubr.bf16.gmra.mrb[0].mxu0 %v214
      %v264 = vpop.f32.mrb[0].mxu0
      %v265 = vadd.f32 1.0, %v264
      %v266 = vpop.f32.mrb[0].mxu0
      %v267 = vpop.f32.mrb[0].mxu0
      %v268 = vadd.f32 1.0, %v267
      %v269 = vpop.f32.mrb[0].mxu0
      %270 = vmatprep.mubr.bf16.mxu0 0
      %271 = vmatmul.mubr.bf16.gmra.mrb[0].mxu0 %v215
      %v272 = vpop.f32.mrb[0].mxu0
      %v273 = vadd.f32 1.0, %v272
      %v274 = vpop.f32.mrb[0].mxu0
      %v275 = vpop.f32.mrb[0].mxu0
      %v276 = vadd.f32 1.0, %v275
      %v277 = vpop.f32.mrb[0].mxu0
      %278 = vmatprep.mubr.bf16.mxu0 0
      %279 = vmatmul.mubr.bf16.gmra.mrb[0].mxu0 %v216
      %v280 = vpop.f32.mrb[0].mxu0
      %v281 = vadd.f32 1.0, %v280
      %v282 = vpop.f32.mrb[0].mxu0
      %v283 = vpop.f32.mrb[0].mxu0
      %v284 = vadd.f32 1.0, %v283
      %v285 = vpop.f32.mrb[0].mxu0
      %286 = vmatprep.mubr.bf16.mxu0 0
      %287 = vmatmul.mubr.bf16.gmra.mrb[0].mxu0 %v217
      %v288 = vpop.f32.mrb[0].mxu0
      %v289 = vadd.f32 1.0, %v288
      %v290 = vpop.f32.mrb[0].mxu0
      %v291 = vpop.f32.mrb[0].mxu0
      %v292 = vadd.f32 1.0, %v291
      %v293 = vpop.f32.mrb[0].mxu0
      %294 = vmatprep.mubr.bf16.mxu0 0
      %295 = vmatmul.mubr.bf16.gmra.mrb[0].mxu0 %v218
      %v296 = vpop.f32.mrb[0].mxu0
      %v297 = vadd.f32 1.0, %v296
      %v298 = vpop.f32.mrb[0].mxu0
      %v299 = vpop.f32.mrb[0].mxu0
      %v300 = vadd.f32 1.0, %v299
      %v301 = vpop.f32.mrb[0].mxu0
      %302 = vmatprep.mubr.bf16.mxu0 0
      %303 = vmatmul.mubr.bf16.gmra.mrb[0].mxu0 %v219
      %v304 = vpop.f32.mrb[0].mxu0
      %v305 = vadd.f32 1.0, %v304
      %v306 = vpop.f32.mrb[0].mxu0
      %v307 = vpop.f32.mrb[0].mxu0
      %v308 = vadd.f32 1.0, %v307
      %v309 = vpop.f32.mrb[0].mxu0
      %310 = vmatprep.mubr.bf16.mxu0 0
      %311 = vmatmul.mubr.bf16.gmra.mrb[0].mxu0 %v220
      %v312 = vpop.f32.mrb[0].mxu0
      %v313 = vadd.f32 1.0, %v312
      %v314 = vpop.f32.mrb[0].mxu0
      %v315 = vpop.f32.mrb[0].mxu0
      %v316 = vadd.f32 1.0, %v315
      %v317 = vpop.f32.mrb[0].mxu0
      %318 = vmatprep.mubr.bf16.mxu0 0
      %319 = vmatmul.mubr.bf16.gmra.mrb[0].mxu0 %v221
      %v320 = vpop.f32.mrb[0].mxu0
      %v321 = vadd.f32 1.0, %v320
      %v322 = vpop.f32.mrb[0].mxu0
      %v323 = vpop.f32.mrb[0].mxu0
      %v324 = vadd.f32 1.0, %v323
      %v325 = vpop.f32.mrb[0].mxu0
      %326 = vdwg.mxu0
      %v327 = vrsqrt.pop %v265
      %v328 = vrsqrt.pop %v268
      %v329 = vrsqrt.pop %v273
      %v330 = vrsqrt.pop %v276
      %v331 = vrsqrt.pop %v281
      %v332 = vrsqrt.pop %v284
      %v333 = vrsqrt.pop %v289
      %v334 = vrsqrt.pop %v292
      %v335 = vrsqrt.pop %v297
      %v336 = vrsqrt.pop %v300
      %v337 = vrsqrt.pop %v305
      %v338 = vrsqrt.pop %v308
      %v339 = vrsqrt.pop %v313
      %v340 = vrsqrt.pop %v316
      %v341 = vrsqrt.pop %v321
      %v342 = vrsqrt.pop %v324
      %v343 = vld [vmem:[%s158] sm:$0xff]
      %v344 = vld [vmem:[%s158 + $0x8] sm:$0xff]
      %v345 = vld [vmem:[%s158 + $0x10] sm:$0xff]
      %v346 = vld [vmem:[%s158 + $0x18] sm:$0xff]
      %v347 = vld [vmem:[%s158 + $0x20] sm:$0xff]
      %v348 = vld [vmem:[%s158 + $0x28] sm:$0xff]
      %v349 = vld [vmem:[%s158 + $0x30] sm:$0xff]
      %v350 = vld [vmem:[%s158 + $0x38] sm:$0xff]
      %v351 = vld [vmem:[%s158 + $0x40] sm:$0xff]
      %v352 = vld [vmem:[%s158 + $0x48] sm:$0xff]
      %v353 = vld [vmem:[%s158 + $0x50] sm:$0xff]
      %v354 = vld [vmem:[%s158 + $0x58] sm:$0xff]
      %v355 = vld [vmem:[%s158 + $0x60] sm:$0xff]
      %v356 = vld [vmem:[%s158 + $0x68] sm:$0xff]
      %v357 = vld [vmem:[%s158 + $0x70] sm:$0xff]
      %v358 = vld [vmem:[%s158 + $0x78] sm:$0xff]
      %360 = vset.pattern.permute.xlu0 0
      %361 = vperm.xlu0 %360, %v327
      %v362 = vpop.permute.xlu0 %361
      %365 = vset.pattern.permute.xlu0 0
      %366 = vperm.xlu0 %365, %v328
      %v367 = vpop.permute.xlu0 %366
      %370 = vset.pattern.permute.xlu0 0
      %371 = vperm.xlu0 %370, %v329
      %v372 = vpop.permute.xlu0 %371
      %375 = vset.pattern.permute.xlu0 0
      %376 = vperm.xlu0 %375, %v330
      %v377 = vpop.permute.xlu0 %376
      %380 = vset.pattern.permute.xlu0 0
      %381 = vperm.xlu0 %380, %v331
      %v382 = vpop.permute.xlu0 %381
      %385 = vset.pattern.permute.xlu0 0
      %386 = vperm.xlu0 %385, %v332
      %v387 = vpop.permute.xlu0 %386
      %390 = vset.pattern.permute.xlu0 0
      %391 = vperm.xlu0 %390, %v333
      %v392 = vpop.permute.xlu0 %391
      %395 = vset.pattern.permute.xlu0 0
      %396 = vperm.xlu0 %395, %v334
      %v397 = vpop.permute.xlu0 %396
      %400 = vset.pattern.permute.xlu0 0
      %401 = vperm.xlu0 %400, %v335
      %v402 = vpop.permute.xlu0 %401
      %405 = vset.pattern.permute.xlu0 0
      %406 = vperm.xlu0 %405, %v336
      %v407 = vpop.permute.xlu0 %406
      %410 = vset.pattern.permute.xlu0 0
      %411 = vperm.xlu0 %410, %v337
      %v412 = vpop.permute.xlu0 %411
      %415 = vset.pattern.permute.xlu0 0
      %416 = vperm.xlu0 %415, %v338
      %v417 = vpop.permute.xlu0 %416
      %420 = vset.pattern.permute.xlu0 0
      %421 = vperm.xlu0 %420, %v339
      %v422 = vpop.permute.xlu0 %421
      %425 = vset.pattern.permute.xlu0 0
      %426 = vperm.xlu0 %425, %v340
      %v427 = vpop.permute.xlu0 %426
      %430 = vset.pattern.permute.xlu0 0
      %431 = vperm.xlu0 %430, %v341
      %v432 = vpop.permute.xlu0 %431
      %435 = vset.pattern.permute.xlu0 0
      %436 = vperm.xlu0 %435, %v342
      %v437 = vpop.permute.xlu0 %436
      %v439 = vmul.f32 %v362, %v343
      %v440 = vmul.f32 %v367, %v344
      %v441 = vmul.f32 %v372, %v345
      %v442 = vmul.f32 %v377, %v346
      %v443 = vmul.f32 %v382, %v347
      %v444 = vmul.f32 %v387, %v348
      %v445 = vmul.f32 %v392, %v349
      %v446 = vmul.f32 %v397, %v350
      %v447 = vmul.f32 %v402, %v351
      %v448 = vmul.f32 %v407, %v352
      %v449 = vmul.f32 %v412, %v353
      %v450 = vmul.f32 %v417, %v354
      %v451 = vmul.f32 %v422, %v355
      %v452 = vmul.f32 %v427, %v356
      %v453 = vmul.f32 %v432, %v357
      %v454 = vmul.f32 %v437, %v358
      %v455 = vpack.c.bf16 %v440, %v439
      %v456 = vpack.c.bf16 %v442, %v441
      %v457 = vpack.c.bf16 %v444, %v443
      %v458 = vpack.c.bf16 %v446, %v445
      %v459 = vpack.c.bf16 %v448, %v447
      %v460 = vpack.c.bf16 %v450, %v449
      %v461 = vpack.c.bf16 %v452, %v451
      %v462 = vpack.c.bf16 %v454, %v453
      %463 = vmatprep.subr.bf16.mxu0 0
      %464 = vmatpush1.bf16.msra.mxu0 %v455
      %465 = vmatprep.subr.bf16.mxu0 0
      %466 = vmatpush1.bf16.msra.mxu0 %v456
      %467 = vmatprep.subr.bf16.mxu0 0
      %468 = vmatpush1.bf16.msra.mxu0 %v457
      %469 = vmatprep.subr.bf16.mxu0 0
      %470 = vmatpush1.bf16.msra.mxu0 %v458
      %471 = vmatprep.subr.bf16.mxu0 0
      %472 = vmatpush1.bf16.msra.mxu0 %v459
      %473 = vmatprep.subr.bf16.mxu0 0
      %474 = vmatpush1.bf16.msra.mxu0 %v460
      %475 = vmatprep.subr.bf16.mxu0 0
      %476 = vmatpush1.bf16.msra.mxu0 %v461
      %477 = vmatprep.subr.bf16.mxu0 0
      %478 = vmatpush1.bf16.msra.mxu0 %v462
      %479 = vmatprep.subr.bf16.mxu0 0
      %480 = vmatpush1.bf16.msra.mxu0 0
      %481 = vmatprep.subr.bf16.mxu0 0
      %482 = vmatpush1.bf16.msra.mxu0 0
      %483 = vmatprep.subr.bf16.mxu0 0
      %484 = vmatpush1.bf16.msra.mxu0 0
      %485 = vmatprep.subr.bf16.mxu0 0
      %486 = vmatpush1.bf16.msra.mxu0 0
      %487 = vmatprep.subr.bf16.mxu0 0
      %488 = vmatpush1.bf16.msra.mxu0 0
      %489 = vmatprep.subr.bf16.mxu0 0
      %490 = vmatpush1.bf16.msra.mxu0 0
      %491 = vmatprep.subr.bf16.mxu0 0
      %492 = vmatpush1.bf16.msra.mxu0 0
      %493 = vmatprep.subr.bf16.mxu0 0
      %494 = vmatpush1.bf16.msra.mxu0 0
      %495 = vmatprep.mubr.bf16.mxu0 0
      %496 = vmatmul.mubr.bf16.gmra.mrb[0].mxu0 %v214
      %v497 = vpop.f32.mrb[0].mxu0
      %v498 = vadd.f32 %v439, %v497
      %v499 = vpop.f32.mrb[0].mxu0
      %v500 = vpop.f32.mrb[0].mxu0
      %v501 = vadd.f32 %v440, %v500
      %v502 = vpop.f32.mrb[0].mxu0
      %503 = vmatprep.mubr.bf16.mxu0 0
      %504 = vmatmul.mubr.bf16.gmra.mrb[0].mxu0 %v215
      %v505 = vpop.f32.mrb[0].mxu0
      %v506 = vadd.f32 %v441, %v505
      %v507 = vpop.f32.mrb[0].mxu0
      %v508 = vpop.f32.mrb[0].mxu0
      %v509 = vadd.f32 %v442, %v508
      %v510 = vpop.f32.mrb[0].mxu0
      %511 = vmatprep.mubr.bf16.mxu0 0
      %512 = vmatmul.mubr.bf16.gmra.mrb[0].mxu0 %v216
      %v513 = vpop.f32.mrb[0].mxu0
      %v514 = vadd.f32 %v443, %v513
      %v515 = vpop.f32.mrb[0].mxu0
      %v516 = vpop.f32.mrb[0].mxu0
      %v517 = vadd.f32 %v444, %v516
      %v518 = vpop.f32.mrb[0].mxu0
      %519 = vmatprep.mubr.bf16.mxu0 0
      %520 = vmatmul.mubr.bf16.gmra.mrb[0].mxu0 %v217
      %v521 = vpop.f32.mrb[0].mxu0
      %v522 = vadd.f32 %v445, %v521
      %v523 = vpop.f32.mrb[0].mxu0
      %v524 = vpop.f32.mrb[0].mxu0
      %v525 = vadd.f32 %v446, %v524
      %v526 = vpop.f32.mrb[0].mxu0
      %527 = vmatprep.mubr.bf16.mxu0 0
      %528 = vmatmul.mubr.bf16.gmra.mrb[0].mxu0 %v218
      %v529 = vpop.f32.mrb[0].mxu0
      %v530 = vadd.f32 %v447, %v529
      %v531 = vpop.f32.mrb[0].mxu0
      %v532 = vpop.f32.mrb[0].mxu0
      %v533 = vadd.f32 %v448, %v532
      %v534 = vpop.f32.mrb[0].mxu0
      %535 = vmatprep.mubr.bf16.mxu0 0
      %536 = vmatmul.mubr.bf16.gmra.mrb[0].mxu0 %v219
      %v537 = vpop.f32.mrb[0].mxu0
      %v538 = vadd.f32 %v449, %v537
      %v539 = vpop.f32.mrb[0].mxu0
      %v540 = vpop.f32.mrb[0].mxu0
      %v541 = vadd.f32 %v450, %v540
      %v542 = vpop.f32.mrb[0].mxu0
      %543 = vmatprep.mubr.bf16.mxu0 0
      %544 = vmatmul.mubr.bf16.gmra.mrb[0].mxu0 %v220
      %v545 = vpop.f32.mrb[0].mxu0
      %v546 = vadd.f32 %v451, %v545
      %v547 = vpop.f32.mrb[0].mxu0
      %v548 = vpop.f32.mrb[0].mxu0
      %v549 = vadd.f32 %v452, %v548
      %v550 = vpop.f32.mrb[0].mxu0
      %551 = vmatprep.mubr.bf16.mxu0 0
      %552 = vmatmul.mubr.bf16.gmra.mrb[0].mxu0 %v221
      %v553 = vpop.f32.mrb[0].mxu0
      %v554 = vadd.f32 %v453, %v553
      %v555 = vpop.f32.mrb[0].mxu0
      %v556 = vpop.f32.mrb[0].mxu0
      %v557 = vadd.f32 %v454, %v556
      %v558 = vpop.f32.mrb[0].mxu0
      %559 = vdwg.mxu0
      %v560 = vmul.f32 %v362, %v498
      %v561 = vmul.f32 %v367, %v501
      %v562 = vmul.f32 %v372, %v506
      %v563 = vmul.f32 %v377, %v509
      %v564 = vmul.f32 %v382, %v514
      %v565 = vmul.f32 %v387, %v517
      %v566 = vmul.f32 %v392, %v522
      %v567 = vmul.f32 %v397, %v525
      %v568 = vmul.f32 %v402, %v530
      %v569 = vmul.f32 %v407, %v533
      %v570 = vmul.f32 %v412, %v538
      %v571 = vmul.f32 %v417, %v541
      %v572 = vmul.f32 %v422, %v546
      %v573 = vmul.f32 %v427, %v549
      %v574 = vmul.f32 %v432, %v554
      %v575 = vmul.f32 %v437, %v557
      %576 = vst [vmem:[%s163] sm:$0xff] %v560
      %577 = vst [vmem:[%s163 + $0x8] sm:$0xff] %v561
      %578 = vst [vmem:[%s163 + $0x10] sm:$0xff] %v562
      %579 = vst [vmem:[%s163 + $0x18] sm:$0xff] %v563
      %580 = vst [vmem:[%s163 + $0x20] sm:$0xff] %v564
      %581 = vst [vmem:[%s163 + $0x28] sm:$0xff] %v565
      %582 = vst [vmem:[%s163 + $0x30] sm:$0xff] %v566
      %583 = vst [vmem:[%s163 + $0x38] sm:$0xff] %v567
      %584 = vst [vmem:[%s163 + $0x40] sm:$0xff] %v568
      %585 = vst [vmem:[%s163 + $0x48] sm:$0xff] %v569
      %586 = vst [vmem:[%s163 + $0x50] sm:$0xff] %v570
      %587 = vst [vmem:[%s163 + $0x58] sm:$0xff] %v571
      %588 = vst [vmem:[%s163 + $0x60] sm:$0xff] %v572
      %589 = vst [vmem:[%s163 + $0x68] sm:$0xff] %v573
      %590 = vst [vmem:[%s163 + $0x70] sm:$0xff] %v574
      %591 = vst [vmem:[%s163 + $0x78] sm:$0xff] %v575
      %p592 = scmp.lt.s32.totalorder %s13, 1
      %s593 = scalar_select %p592, %s13, 1
      %s594 = smul.addr %s593, 16
      %s595 = smul.addr %s594, 8
      %s596 = scalar_lea.vmem %s2, %s595
      // Predicated region
      $region29: #{gcn_forward.1} parent=27 // pred_check
        %p597 = pneg %p83
      $region30: #{gcn_forward.1} parent=27 // pred_check_branch
        %599 = sbr.rel (%p597) target = $region32
      $region31: #{gcn_forward.1} parent=27 // pred_region
        _
      $region32: #{gcn_forward.1} parent=27 // pred_fallthru
        _
    $region28: #{gcn_forward.1} parent=5 // pred_fallthru
      _
    %p600 = scmp.le.s32.totalorder 2, %s8
    // Predicated region
    $region33: #{gcn_forward.1} parent=5 // pred_check
      %p601 = pneg %p600
    $region34: #{gcn_forward.1} parent=5 // pred_check_branch
      %603 = sbr.rel (%p601) target = $region36
    $region35: #{gcn_forward.1} parent=5 // pred_region
      %s604 = ssub.s32 %s8, 2
      // Predicated region
      $region37: #{gcn_forward.1} parent=35 // pred_check
        %p605 = pneg %p89
      $region38: #{gcn_forward.1} parent=35 // pred_check_branch
        %607 = sbr.rel (%p605) target = $region40
      $region39: #{gcn_forward.1} parent=35 // pred_region
        %p608 = scmp.lt.s32.totalorder %s14, 1
        %s609 = scalar_select %p608, %s14, 1
        %s610 = smul.addr %s609, 16
        %s611 = smul.addr %s610, 8
        %s612 = scalar_lea.vmem %s2, %s611
      $region40: #{gcn_forward.1} parent=35 // pred_fallthru
        _
    $region36: #{gcn_forward.1} parent=5 // pred_fallthru
      _
  $region6: #{gcn_forward.1} parent=0 // loop_footer
    %s12 = sadd.s32 1, %s8
  $region7: #{gcn_forward.1} parent=0 // loop_footer_branch
    %7 = sbr.rel target = $region3
  $region8: #{gcn_forward.1} parent=0 // loop_exit
    _

</llo_original>
